<compile_context>
chip_gen: v7x
topology: tpu7x:2x2x1
jax: 0.10.0
libtpu: 0.0.40
codegen_flags: <defaults>
</compile_context>

<pallas_src>
import functools

import jax
import jax.numpy as jnp
from jax import lax
from jax.experimental import pallas as pl
from jax.experimental.pallas import tpu as pltpu


def _round_up(x, m):
    return (x + m - 1) // m * m


def _pick_tile(total, candidates):
    for c in candidates:
        if total % c == 0:
            return c
    return candidates[-1]


def _mix32(x):
    # splitmix32-style mixer (u32 VPU integer path).
    x = x ^ (x >> 16)
    x = x * jnp.uint32(0x7FEB352D)
    x = x ^ (x >> 15)
    x = x * jnp.uint32(0x846CA68B)
    x = x ^ (x >> 16)
    return x


def _dense_kernel(seed_ref, x_ref, w_ref, b_ref, o_ref, acc_ref, *,
                  apply_relu, dropout_p, tm, tn):
    # Hoist ALL grid queries and the SMEM seed read out of the pl.when bodies.
    i = pl.program_id(0)
    j = pl.program_id(1)
    k = pl.program_id(2)
    nk = pl.num_programs(2)
    if dropout_p > 0.0:
        seed_u = seed_ref[0].astype(jnp.uint32)

    @pl.when(k == 0)
    def _init():
        acc_ref[...] = jnp.zeros_like(acc_ref)

    # x tile: (tm, tk); w tile: (tk, tn) — weights are stored pre-transposed, so
    # this is the canonical MXU feed (no per-tile transpose).
    a = x_ref[...]
    w = w_ref[...]
    if a.dtype != w.dtype:
        a = a.astype(w.dtype)          # bf16 MXU path; accumulation stays f32
    acc_ref[...] += jnp.dot(a, w, preferred_element_type=jnp.float32)

    @pl.when(k == nk - 1)
    def _finalize():
        y = acc_ref[...] + b_ref[...].astype(jnp.float32)
        if apply_relu:
            y = jnp.maximum(y, 0.0)
        if dropout_p > 0.0:
            keep_thresh = jnp.uint32(
                min(int((1.0 - dropout_p) * 4294967296.0), 4294967295))
            # Counter-based PRNG: hash small row/col index vectors, combine, one
            # cheap full-tile mix.  Decorrelated across tiles via global indices.
            rows = (lax.broadcasted_iota(jnp.int32, (tm, 1), 0)
                    + i * tm).astype(jnp.uint32)
            cols = (lax.broadcasted_iota(jnp.int32, (1, tn), 1)
                    + j * tn).astype(jnp.uint32)
            row_h = _mix32(rows + seed_u)
            col_h = _mix32(cols + seed_u * jnp.uint32(0x9E3779B9)
                           + jnp.uint32(0x85EBCA6B))
            bits = row_h ^ col_h                       # broadcast to (tm, tn)
            bits = bits * jnp.uint32(0x9E3779B1)       # single full-tile mul
            bits = bits ^ (bits >> 16)
            keep = bits < keep_thresh
            y = jnp.where(keep, y * (1.0 / (1.0 - dropout_p)), 0.0)
        o_ref[...] = y.astype(o_ref.dtype)


def prepare_dense_params(weight, bias, *, param_dtype=jnp.float32):
    """One-time parameter preparation (NOT per forward).

    weight: (N, K) PyTorch nn.Linear layout; bias: (N,).
    Returns weight padded + transposed to (k_pad, n_pad) in `param_dtype`
    (bf16 halves streamed HBM bytes) and bias padded to (1, n_pad) f32.
    """
    N, K = weight.shape
    assert bias.shape == (N,)
    n_pad = _round_up(N, 128)
    k_pad = _round_up(K, 128)
    wt = jnp.transpose(weight)                       # (K, N), stored layout
    if (k_pad, n_pad) != (K, N):
        wt = jnp.pad(wt, ((0, k_pad - K), (0, n_pad - N)))
    wt = wt.astype(param_dtype)
    bp = bias if n_pad == N else jnp.pad(bias, (0, n_pad - N))
    bp = bp.reshape(1, n_pad).astype(jnp.float32)
    return {"w_t": wt, "b": bp, "out_features": N, "in_features": K}


def alex_dense_pallas(x, prep, *, apply_relu=True, dropout_p=0.5,
                      training=True, seed=0):
    """Fused Linear (+bias) -> optional ReLU -> optional Dropout.

    x: (M, K) f32; prep: output of prepare_dense_params.
    """
    M, K = x.shape
    wt, bp = prep["w_t"], prep["b"]
    N = prep["out_features"]
    assert prep["in_features"] == K
    k_pad, n_pad = wt.shape

    p = float(dropout_p) if training else 0.0

    # ---- tile selection ------------------------------------------------------
    if M >= 256:
        tm = 256
        m_pad = _round_up(M, 256)
    elif M >= 128:
        tm = 128
        m_pad = _round_up(M, 128)
    else:
        m_pad = _round_up(M, 8)
        tm = m_pad
    tn = _pick_tile(n_pad, (512, 256, 128))
    tk = _pick_tile(k_pad, (2048, 1024, 512, 256, 128))

    x_itemsize = jnp.dtype(x.dtype).itemsize
    w_itemsize = jnp.dtype(wt.dtype).itemsize

    def _vmem_bytes(tm_, tn_, tk_):
        return (2 * tm_ * tk_ * x_itemsize      # x double-buffer
                + 2 * tk_ * tn_ * w_itemsize    # weight double-buffer
                + 2 * tm_ * tn_ * x_itemsize    # output double-buffer
                + tm_ * tn_ * 4                 # f32 accumulator
                + 2 * tn_ * 4)                  # bias
    # Conservative buffer budget so the same tiling is safe on v7x (64 MiB VMEM)
    # as well as v5e/v6e (128 MiB).
    budget = 24 * 1024 * 1024
    while _vmem_bytes(tm, tn, tk) > budget and tk > 128:
        tk //= 2
    while _vmem_bytes(tm, tn, tk) > budget and tn > 128:
        tn //= 2
    vmem_limit = int(min(48 * 1024 * 1024,
                         max(32 * 1024 * 1024, 2 * _vmem_bytes(tm, tn, tk))))

    # ---- pad activations only (cheap; weight/bias padding hoisted to prepare) -
    xp = x if (m_pad == M and k_pad == K) else jnp.pad(
        x, ((0, m_pad - M), (0, k_pad - K)))
    seed_arr = jnp.asarray([seed], dtype=jnp.int32)

    grid = (m_pad // tm, n_pad // tn, k_pad // tk)

    kernel = functools.partial(
        _dense_kernel, apply_relu=apply_relu, dropout_p=p, tm=tm, tn=tn)

    g_i, g_j, _ = grid
    cost = pl.CostEstimate(
        flops=2 * m_pad * k_pad * n_pad,
        transcendentals=0,
        bytes_accessed=(g_i * k_pad * n_pad * w_itemsize    # weight re-streamed per i-block
                        + g_j * m_pad * k_pad * x_itemsize  # x re-streamed per j-block
                        + m_pad * n_pad * x_itemsize        # output
                        + n_pad * 4))

    out = pl.pallas_call(
        kernel,
        out_shape=jax.ShapeDtypeStruct((m_pad, n_pad), x.dtype),
        grid_spec=pltpu.PrefetchScalarGridSpec(
            num_scalar_prefetch=1,            # dropout seed lands in SMEM
            grid=grid,
            in_specs=[
                pl.BlockSpec((tm, tk), lambda i, j, k, seed: (i, k)),
                pl.BlockSpec((tk, tn), lambda i, j, k, seed: (k, j)),
                pl.BlockSpec((1, tn), lambda i, j, k, seed: (0, j)),
            ],
            out_specs=pl.BlockSpec((tm, tn), lambda i, j, k, seed: (i, j)),
            scratch_shapes=[pltpu.VMEM((tm, tn), jnp.float32)],
        ),
        compiler_params=pltpu.CompilerParams(
            dimension_semantics=("parallel", "parallel", "arbitrary"),
            vmem_limit_bytes=vmem_limit),
        cost_estimate=cost,
    )(seed_arr, xp, wt, bp)

    return out[:M, :N]


def prepare_alex_output_params(w1, b1, w2, b2, w3, b3, *,
                               param_dtype=jnp.float32):
    """Pad / transpose / (optionally bf16-)cast all parameters ONCE."""
    return {
        "fc1": prepare_dense_params(w1, b1, param_dtype=param_dtype),
        "fc2": prepare_dense_params(w2, b2, param_dtype=param_dtype),
        "fc3": prepare_dense_params(w3, b3, param_dtype=param_dtype),
    }


def alex_output_block(x, params, *, training=True, seed=0):
    """AlexOutputBlock forward: AlexDense -> AlexDense -> Linear."""
    h = alex_dense_pallas(x, params["fc1"], apply_relu=True, dropout_p=0.5,
                          training=training, seed=seed * 3 + 1)
    h = alex_dense_pallas(h, params["fc2"], apply_relu=True, dropout_p=0.5,
                          training=training, seed=seed * 3 + 2)
    out = alex_dense_pallas(h, params["fc3"], apply_relu=False, dropout_p=0.0,
                            training=False, seed=0)
    return out


def _init_linear(key, out_f, in_f):
    # Mimics PyTorch nn.Linear default init: U(-1/sqrt(in), 1/sqrt(in)).
    kw, kb = jax.random.split(key)
    bound = 1.0 / jnp.sqrt(jnp.float32(in_f))
    w = jax.random.uniform(kw, (out_f, in_f), minval=-bound, maxval=bound,
                           dtype=jnp.float32)
    b = jax.random.uniform(kb, (out_f,), minval=-bound, maxval=bound,
                           dtype=jnp.float32)
    return w, b


if __name__ == "__main__":
    # Small shapes consistent with the module (mid_channels shrunk from 4096).
    batch, in_channels, mid_channels, classes = 8, 64, 128, 10

    key = jax.random.PRNGKey(0)
    kx, k1, k2, k3 = jax.random.split(key, 4)
    x = jax.random.normal(kx, (batch, in_channels), dtype=jnp.float32)

    w1, b1 = _init_linear(k1, mid_channels, in_channels)
    w2, b2 = _init_linear(k2, mid_channels, mid_channels)
    w3, b3 = _init_linear(k3, classes, mid_channels)

    # Parameters are padded / transposed / cast ONCE here, not per forward call.
    params_f32 = prepare_alex_output_params(w1, b1, w2, b2, w3, b3,
                                            param_dtype=jnp.float32)
    params_bf16 = prepare_alex_output_params(w1, b1, w2, b2, w3, b3,
                                             param_dtype=jnp.bfloat16)

    # Training-mode forward (module default .train()); dropout mask comes from the
    # in-kernel counter-based hash PRNG (values differ from torch's RNG stream).
    out_train = jax.block_until_ready(
        alex_output_block(x, params_bf16, training=True, seed=123))
    assert out_train.shape == (batch, classes)
    assert bool(jnp.all(jnp.isfinite(out_train)))

    # Eval-mode forward, f32 weights: exact comparison against pure-JAX reference.
    out_eval = jax.block_until_ready(
        alex_output_block(x, params_f32, training=False, seed=0))
    h_ref = jnp.maximum(x @ w1.T + b1, 0.0)
    h_ref = jnp.maximum(h_ref @ w2.T + b2, 0.0)
    ref = h_ref @ w3.T + b3
    assert jnp.allclose(out_eval, ref, atol=1e-4, rtol=1e-4)

    # Eval-mode forward, bf16-weight (bandwidth-optimized) path: looser tolerance.
    out_eval_bf16 = jax.block_until_ready(
        alex_output_block(x, params_bf16, training=False, seed=0))
    assert jnp.allclose(out_eval_bf16, ref, atol=1e-1, rtol=5e-2)

    print("KERNEL_OK")
</pallas_src>

<mosaic_0001>
module attributes {stable_mosaic.version = 11 : i64} {
  func.func @_dense_kernel(%arg0: i32, %arg1: i32, %arg2: i32, %arg3: memref<1xi32, #tpu.memory_space<smem>>, %arg4: memref<8x128xf32, #tpu.memory_space<vmem>>, %arg5: memref<128x128xbf16, #tpu.memory_space<vmem>>, %arg6: memref<1x128xf32, #tpu.memory_space<vmem>>, %arg7: memref<8x128xf32, #tpu.memory_space<vmem>>, %arg8: memref<8x128xf32, #tpu.memory_space<vmem>>) attributes {dimension_semantics = [#tpu.dimension_semantics<parallel>, #tpu.dimension_semantics<parallel>, #tpu.dimension_semantics<arbitrary>], iteration_bounds = array<i64: 1, 1, 1>, scalar_prefetch = 1 : i64, scratch_operands = 1 : i64, tpu.core_type = #tpu.core_type<tc>, window_params = [{transform_indices = @transform_0, window_bounds = array<i64: 8, 128>}, {transform_indices = @transform_1, window_bounds = array<i64: 128, 128>}, {transform_indices = @transform_2, window_bounds = array<i64: 1, 128>}, {transform_indices = @transform_3, window_bounds = array<i64: 8, 128>}]} {
    %c0 = arith.constant 0 : index
    %0 = memref.load %arg3[%c0] : memref<1xi32, #tpu.memory_space<smem>>
    %c0_i32 = arith.constant 0 : i32
    %1 = arith.cmpi eq, %arg2, %c0_i32 : i32
    %2 = arith.extui %1 : i1 to i32
    %c0_i32_0 = arith.constant 0 : i32
    %3 = arith.cmpi ne, %2, %c0_i32_0 : i32
    scf.if %3 {
      %cst_11 = arith.constant 0.000000e+00 : f32
      %14 = vector.broadcast %cst_11 : f32 to vector<8x128xf32>
      %c0_12 = arith.constant 0 : index
      %c0_13 = arith.constant 0 : index
      %15 = vector.load %arg8[%c0_12, %c0_13] : memref<8x128xf32, #tpu.memory_space<vmem>>, vector<8x128xf32>
      tpu.vector_store %arg8[%c0_12, %c0_13], %14 {strides = array<i32>} : memref<8x128xf32, #tpu.memory_space<vmem>>, vector<8x128xf32>,
    } else {
    }
    %c0_1 = arith.constant 0 : index
    %c0_2 = arith.constant 0 : index
    %4 = vector.load %arg4[%c0_1, %c0_2] : memref<8x128xf32, #tpu.memory_space<vmem>>, vector<8x128xf32>
    %c0_3 = arith.constant 0 : index
    %c0_4 = arith.constant 0 : index
    %5 = vector.load %arg5[%c0_3, %c0_4] : memref<128x128xbf16, #tpu.memory_space<vmem>>, vector<128x128xbf16>
    %6 = arith.truncf %4 : vector<8x128xf32> to vector<8x128xbf16>
    %c0_5 = arith.constant 0 : index
    %c0_6 = arith.constant 0 : index
    %7 = vector.load %arg8[%c0_5, %c0_6] : memref<8x128xf32, #tpu.memory_space<vmem>>, vector<8x128xf32>
    %cst = arith.constant dense<0.000000e+00> : vector<8x128xf32>
    %8 = tpu.matmul %6, %5, %cst {dimension_numbers = #tpu.dot_dimension_numbers<[1], [0], [0], [1], [0, 0, 1, 1], [], []>} : vector<8x128xbf16>, vector<128x128xbf16>, vector<8x128xf32> -> vector<8x128xf32>
    %9 = arith.addf %7, %8 : vector<8x128xf32>
    %c0_7 = arith.constant 0 : index
    %c0_8 = arith.constant 0 : index
    %10 = vector.load %arg8[%c0_7, %c0_8] : memref<8x128xf32, #tpu.memory_space<vmem>>, vector<8x128xf32>
    tpu.vector_store %arg8[%c0_7, %c0_8], %9 {strides = array<i32>} : memref<8x128xf32, #tpu.memory_space<vmem>>, vector<8x128xf32>,
    %c0_i32_9 = arith.constant 0 : i32
    %11 = arith.cmpi eq, %arg2, %c0_i32_9 : i32
    %12 = arith.extui %11 : i1 to i32
    %c0_i32_10 = arith.constant 0 : i32
    %13 = arith.cmpi ne, %12, %c0_i32_10 : i32
    scf.if %13 {
      %c0_11 = arith.constant 0 : index
      %c0_12 = arith.constant 0 : index
      %14 = vector.load %arg8[%c0_11, %c0_12] : memref<8x128xf32, #tpu.memory_space<vmem>>, vector<8x128xf32>
      %c0_13 = arith.constant 0 : index
      %c0_14 = arith.constant 0 : index
      %15 = vector.load %arg6[%c0_13, %c0_14] : memref<1x128xf32, #tpu.memory_space<vmem>>, vector<1x128xf32>
      %16 = vector.broadcast %15 : vector<1x128xf32> to vector<8x128xf32>
      %17 = arith.addf %14, %16 : vector<8x128xf32>
      %cst_15 = arith.constant 0.000000e+00 : f32
      %18 = vector.broadcast %cst_15 : f32 to vector<8x128xf32>
      %19 = arith.maximumf %17, %18 : vector<8x128xf32>
      %20 = tpu.iota {dimensions = array<i32: 0>} : vector<8x1xi32>
      %c8_i32 = arith.constant 8 : i32
      %21 = arith.muli %arg0, %c8_i32 : i32
      %22 = vector.broadcast %21 : i32 to vector<8x1xi32>
      %23 = arith.addi %20, %22 : vector<8x1xi32>
      %24 = tpu.iota {dimensions = array<i32: 1>} : vector<1x128xi32>
      %c128_i32 = arith.constant 128 : i32
      %25 = arith.muli %arg1, %c128_i32 : i32
      %26 = vector.broadcast %25 : i32 to vector<1x128xi32>
      %27 = arith.addi %24, %26 : vector<1x128xi32>
      %28 = vector.broadcast %0 : i32 to vector<8x1xi32>
      %29 = arith.addi %23, %28 : vector<8x1xi32>
      %c16_i32 = arith.constant 16 : i32
      %30 = vector.broadcast %c16_i32 : i32 to vector<8x1xi32>
      %31 = arith.shrui %29, %30 : vector<8x1xi32>
      %32 = arith.xori %29, %31 : vector<8x1xi32>
      %c2146121005_i32 = arith.constant 2146121005 : i32
      %33 = vector.broadcast %c2146121005_i32 : i32 to vector<8x1xi32>
      %34 = arith.muli %32, %33 : vector<8x1xi32>
      %c15_i32 = arith.constant 15 : i32
      %35 = vector.broadcast %c15_i32 : i32 to vector<8x1xi32>
      %36 = arith.shrui %34, %35 : vector<8x1xi32>
      %37 = arith.xori %34, %36 : vector<8x1xi32>
      %c-2073254261_i32 = arith.constant -2073254261 : i32
      %38 = vector.broadcast %c-2073254261_i32 : i32 to vector<8x1xi32>
      %39 = arith.muli %37, %38 : vector<8x1xi32>
      %c16_i32_16 = arith.constant 16 : i32
      %40 = vector.broadcast %c16_i32_16 : i32 to vector<8x1xi32>
      %41 = arith.shrui %39, %40 : vector<8x1xi32>
      %42 = arith.xori %39, %41 : vector<8x1xi32>
      %c-1640531527_i32 = arith.constant -1640531527 : i32
      %43 = arith.muli %0, %c-1640531527_i32 : i32
      %44 = vector.broadcast %43 : i32 to vector<1x128xi32>
      %45 = arith.addi %27, %44 : vector<1x128xi32>
      %c-2048144789_i32 = arith.constant -2048144789 : i32
      %46 = vector.broadcast %c-2048144789_i32 : i32 to vector<1x128xi32>
      %47 = arith.addi %45, %46 : vector<1x128xi32>
      %c16_i32_17 = arith.constant 16 : i32
      %48 = vector.broadcast %c16_i32_17 : i32 to vector<1x128xi32>
      %49 = arith.shrui %47, %48 : vector<1x128xi32>
      %50 = arith.xori %47, %49 : vector<1x128xi32>
      %c2146121005_i32_18 = arith.constant 2146121005 : i32
      %51 = vector.broadcast %c2146121005_i32_18 : i32 to vector<1x128xi32>
      %52 = arith.muli %50, %51 : vector<1x128xi32>
      %c15_i32_19 = arith.constant 15 : i32
      %53 = vector.broadcast %c15_i32_19 : i32 to vector<1x128xi32>
      %54 = arith.shrui %52, %53 : vector<1x128xi32>
      %55 = arith.xori %52, %54 : vector<1x128xi32>
      %c-2073254261_i32_20 = arith.constant -2073254261 : i32
      %56 = vector.broadcast %c-2073254261_i32_20 : i32 to vector<1x128xi32>
      %57 = arith.muli %55, %56 : vector<1x128xi32>
      %c16_i32_21 = arith.constant 16 : i32
      %58 = vector.broadcast %c16_i32_21 : i32 to vector<1x128xi32>
      %59 = arith.shrui %57, %58 : vector<1x128xi32>
      %60 = arith.xori %57, %59 : vector<1x128xi32>
      %61 = vector.broadcast %42 : vector<8x1xi32> to vector<8x128xi32>
      %62 = vector.broadcast %60 : vector<1x128xi32> to vector<8x128xi32>
      %63 = arith.xori %61, %62 : vector<8x128xi32>
      %c-1640531535_i32 = arith.constant -1640531535 : i32
      %64 = vector.broadcast %c-1640531535_i32 : i32 to vector<8x128xi32>
      %65 = arith.muli %63, %64 : vector<8x128xi32>
      %c16_i32_22 = arith.constant 16 : i32
      %66 = vector.broadcast %c16_i32_22 : i32 to vector<8x128xi32>
      %67 = arith.shrui %65, %66 : vector<8x128xi32>
      %68 = arith.xori %65, %67 : vector<8x128xi32>
      %c-2147483648_i32 = arith.constant -2147483648 : i32
      %69 = vector.broadcast %c-2147483648_i32 : i32 to vector<8x128xi32>
      %70 = arith.cmpi ult, %68, %69 : vector<8x128xi32>
      %cst_23 = arith.constant 2.000000e+00 : f32
      %71 = vector.broadcast %cst_23 : f32 to vector<8x128xf32>
      %72 = arith.mulf %19, %71 : vector<8x128xf32>
      %cst_24 = arith.constant 0.000000e+00 : f32
      %73 = vector.broadcast %cst_24 : f32 to vector<8x128xf32>
      %74 = arith.select %70, %72, %73 : vector<8x128xi1>, vector<8x128xf32>
      %c0_25 = arith.constant 0 : index
      %c0_26 = arith.constant 0 : index
      %75 = vector.load %arg7[%c0_25, %c0_26] : memref<8x128xf32, #tpu.memory_space<vmem>>, vector<8x128xf32>
      tpu.vector_store %arg7[%c0_25, %c0_26], %74 {strides = array<i32>} : memref<8x128xf32, #tpu.memory_space<vmem>>, vector<8x128xf32>,
    } else {
    }
    return
  }
  func.func @transform_0(%arg0: i32, %arg1: i32, %arg2: i32, %arg3: memref<1xi32, #tpu.memory_space<smem>>) -> (i32, i32) {
    %c0_i32 = arith.constant 0 : i32
    return %arg0, %arg2 : i32, i32
  }
  func.func @transform_1(%arg0: i32, %arg1: i32, %arg2: i32, %arg3: memref<1xi32, #tpu.memory_space<smem>>) -> (i32, i32) {
    %c0_i32 = arith.constant 0 : i32
    return %arg2, %arg1 : i32, i32
  }
  func.func @transform_2(%arg0: i32, %arg1: i32, %arg2: i32, %arg3: memref<1xi32, #tpu.memory_space<smem>>) -> (i32, i32) {
    %c0_i32 = arith.constant 0 : i32
    %c0_i32_0 = arith.constant 0 : i32
    return %c0_i32, %arg1 : i32, i32
  }
  func.func @transform_3(%arg0: i32, %arg1: i32, %arg2: i32, %arg3: memref<1xi32, #tpu.memory_space<smem>>) -> (i32, i32) {
    %c0_i32 = arith.constant 0 : i32
    return %arg0, %arg1 : i32, i32
  }
}

</mosaic_0001>

<llo_original>
// kernel: tpu_custom_call.1
$region0: #{tpu_custom_call.1}
  #allocation0 [shape = 'u32[]', space=smem, size = 0x4, offset = 0x4, fixed_abs, tag = 'smem constant byte address 0x4 - core index']
  #allocation1 [shape = 'u32[144,128]{1,0:T(1,128)}', space=vmem, size = 0x12000, scoped, tag = 'internal scratch']
  #allocation2 [shape = 'f32[8,128]{1,0:T(8,128)}', space=vmem, size = 0x1000, scoped, tag = 'scratch operand']
  #allocation3 [shape = 's32[1]{0}', space=sflag, size = 0x4, scoped, tag = 'scoped memory for tpu_custom_call.1']
  #allocation4 [shape = 's32[1]{0:T(128)S(6)}', space=smem, size = 0x200, scoped, tag = 'prefetched SMEM operand 0']
  %s0 = inlined_call_operand.<no memory space> [shape: s32[1], index: 0, kind: input, shape index: {}]
  %s1 = inlined_call_operand.hbm [shape: f32[8,128], index: 1, kind: input, shape index: {}]
  %s2 = inlined_call_operand.hbm [shape: bf16[128,128], index: 2, kind: input, shape index: {}]
  %s3 = inlined_call_operand.vmem [shape: f32[1,128], index: 3, kind: input, shape index: {}]
  %s4 = inlined_call_operand.hbm [shape: f32[8,128], index: 4, kind: output, shape index: {}]
  %s5 = sld [smem:[#allocation0]]
  $region38: #{tpu_custom_call.1} parent=0
    _
  %s7 = ssub.s32 1, %s5
  %s8 = scalar_select 0, %s7, %s5
  %9 = sst [smem:[#allocation4]] %s0
  $region1: #{tpu_custom_call.1} parent=0
    #allocation5 [shape = 'u8[4096]{0}', space=vmem, size = 0x1000, scoped, tag = 'input window, operand 1, single buffered']
    #allocation6 [shape = 's32[1]{0}', space=sflag, size = 0x4, scoped, tag = 'scoped memory for tpu_custom_call.1']
    #allocation7 [shape = 's32[1]{0}', space=sflag, size = 0x4, scoped, tag = 'scoped memory for tpu_custom_call.1']
    #allocation8 [shape = 'u8[32768]{0}', space=vmem, size = 0x8000, scoped, tag = 'input window, operand 2, single buffered']
    #allocation9 [shape = 's32[1]{0}', space=sflag, size = 0x4, scoped, tag = 'scoped memory for tpu_custom_call.1']
    #allocation10 [shape = 'u8[4096]{0}', space=vmem, size = 0x1000, scoped, tag = 'output window, operand 0, single buffered']
    %10 = vsyncpa [#allocation6], 0
    %11 = vsyncpa [#allocation9], 0
    %12 = vsyncpa [#allocation7], 0
    // Predicated region
    $region2: #{tpu_custom_call.1} parent=1 // pred_check
      _
    $region3: #{tpu_custom_call.1} parent=1 // pred_check_branch
      %14 = sbr.rel (0) target = $region5
    $region4: #{tpu_custom_call.1} parent=1 // pred_region
      %s16 = ssub.s32 128, 128
      %17 = vsyncadd [#allocation6], %s16
      %s19 = sshll.u32 [#allocation5], 4
      %s20 = int_to_ptr.vmem [resolvable:$true] %s19
      %22 = dma.hbm_to_vmem [thread:$0]  %s1, 128, %s20, [#allocation6]
    $region5: #{tpu_custom_call.1} parent=1 // pred_fallthru
      _
    // Predicated region
    $region6: #{tpu_custom_call.1} parent=1 // pred_check
      _
    $region7: #{tpu_custom_call.1} parent=1 // pred_check_branch
      %24 = sbr.rel (0) target = $region9
    $region8: #{tpu_custom_call.1} parent=1 // pred_region
      %s26 = ssub.s32 1024, 1024
      %27 = vsyncadd [#allocation9], %s26
      %s28 = sshll.u32 [#allocation8], 4
      %s29 = int_to_ptr.vmem [resolvable:$true] %s28
      %34 = dma.hbm_to_vmem [thread:$0]  %s2, 1024, %s29, [#allocation9], 64, 64, 4
    $region9: #{tpu_custom_call.1} parent=1 // pred_fallthru
      _
    // Predicated region
    $region10: #{tpu_custom_call.1} parent=1 // pred_check
      _
    $region11: #{tpu_custom_call.1} parent=1 // pred_check_branch
      %36 = sbr.rel (0) target = $region13
    $region12: #{tpu_custom_call.1} parent=1 // pred_region
      _
    $region13: #{tpu_custom_call.1} parent=1 // pred_fallthru
      _
    // Predicated region
    $region14: #{tpu_custom_call.1} parent=1 // pred_check
      _
    $region15: #{tpu_custom_call.1} parent=1 // pred_check_branch
      %38 = sbr.rel (0) target = $region17
    $region16: #{tpu_custom_call.1} parent=1 // pred_region
      %39 = dma.done [#allocation6], 128
    $region17: #{tpu_custom_call.1} parent=1 // pred_fallthru
      _
    // Predicated region
    $region18: #{tpu_custom_call.1} parent=1 // pred_check
      _
    $region19: #{tpu_custom_call.1} parent=1 // pred_check_branch
      %41 = sbr.rel (0) target = $region21
    $region20: #{tpu_custom_call.1} parent=1 // pred_region
      %42 = dma.done [#allocation9], 1024
    $region21: #{tpu_custom_call.1} parent=1 // pred_fallthru
      _
    %s44 = sld [smem:[#allocation4]]
    %p45 = scmp.eq.s32.totalorder 0, 0
    // Predicated region
    $region22: #{tpu_custom_call.1} parent=1 // pred_check
      %p46 = pneg %p45
    $region23: #{tpu_custom_call.1} parent=1 // pred_check_branch
      %48 = sbr.rel (%p46) target = $region25
    $region24: #{tpu_custom_call.1} parent=1 // pred_region
      %49 = vst [vmem:[#allocation2] sm:$0xff] 0.0
    $region25: #{tpu_custom_call.1} parent=1 // pred_fallthru
      _
    %v50 = vld [vmem:[#allocation5] sm:$0xff]
    %v51 = vld [vmem:[#allocation8] sm:$0xf]
    %v52 = vld [vmem:[#allocation8 + $0x4] sm:$0xf]
    %v53 = vld [vmem:[#allocation8 + $0x8] sm:$0xf]
    %v54 = vld [vmem:[#allocation8 + $0xc] sm:$0xf]
    %v55 = vld [vmem:[#allocation8 + $0x10] sm:$0xf]
    %v56 = vld [vmem:[#allocation8 + $0x14] sm:$0xf]
    %v57 = vld [vmem:[#allocation8 + $0x18] sm:$0xf]
    %v58 = vld [vmem:[#allocation8 + $0x1c] sm:$0xf]
    %v59 = vld [vmem:[#allocation8 + $0x20] sm:$0xf]
    %v60 = vld [vmem:[#allocation8 + $0x24] sm:$0xf]
    %v61 = vld [vmem:[#allocation8 + $0x28] sm:$0xf]
    %v62 = vld [vmem:[#allocation8 + $0x2c] sm:$0xf]
    %v63 = vld [vmem:[#allocation8 + $0x30] sm:$0xf]
    %v64 = vld [vmem:[#allocation8 + $0x34] sm:$0xf]
    %v65 = vld [vmem:[#allocation8 + $0x38] sm:$0xf]
    %v66 = vld [vmem:[#allocation8 + $0x3c] sm:$0xf]
    %v67 = vpack.c.bf16 %v50, %v50
    %v68 = vld [vmem:[#allocation2] sm:$0xff]
    %v85 = vunpack.c.l.b16 %v51
    %v86 = vunpack.c.l.b16 %v52
    %v87 = vunpack.c.l.b16 %v53
    %v88 = vunpack.c.l.b16 %v54
    %v89 = vunpack.c.l.b16 %v55
    %v90 = vunpack.c.l.b16 %v56
    %v91 = vunpack.c.l.b16 %v57
    %v92 = vunpack.c.l.b16 %v58
    %v93 = vunpack.c.l.b16 %v59
    %v94 = vunpack.c.l.b16 %v60
    %v95 = vunpack.c.l.b16 %v61
    %v96 = vunpack.c.l.b16 %v62
    %v97 = vunpack.c.l.b16 %v63
    %v98 = vunpack.c.l.b16 %v64
    %v99 = vunpack.c.l.b16 %v65
    %v100 = vunpack.c.l.b16 %v66
    %v101 = vpack.c.b16 %v86, %v85
    %v102 = vpack.c.b16 %v88, %v87
    %v103 = vpack.c.b16 %v90, %v89
    %v104 = vpack.c.b16 %v92, %v91
    %v105 = vpack.c.b16 %v94, %v93
    %v106 = vpack.c.b16 %v96, %v95
    %v107 = vpack.c.b16 %v98, %v97
    %v108 = vpack.c.b16 %v100, %v99
    %117 = vmatprep.subr.bf16.mxu0 0
    %118 = vmatpush1.bf16.msra.mxu0 %v101
    %119 = vmatprep.subr.bf16.mxu0 0
    %120 = vmatpush1.bf16.msra.mxu0 %v102
    %121 = vmatprep.subr.bf16.mxu0 0
    %122 = vmatpush1.bf16.msra.mxu0 %v103
    %123 = vmatprep.subr.bf16.mxu0 0
    %124 = vmatpush1.bf16.msra.mxu0 %v104
    %125 = vmatprep.subr.bf16.mxu0 0
    %126 = vmatpush1.bf16.msra.mxu0 %v105
    %127 = vmatprep.subr.bf16.mxu0 0
    %128 = vmatpush1.bf16.msra.mxu0 %v106
    %129 = vmatprep.subr.bf16.mxu0 0
    %130 = vmatpush1.bf16.msra.mxu0 %v107
    %131 = vmatprep.subr.bf16.mxu0 0
    %132 = vmatpush1.bf16.msra.mxu0 %v108
    %133 = vmatprep.subr.bf16.mxu0 0
    %134 = vmatpush1.bf16.msra.mxu0 0
    %135 = vmatprep.subr.bf16.mxu0 0
    %136 = vmatpush1.bf16.msra.mxu0 0
    %137 = vmatprep.subr.bf16.mxu0 0
    %138 = vmatpush1.bf16.msra.mxu0 0
    %139 = vmatprep.subr.bf16.mxu0 0
    %140 = vmatpush1.bf16.msra.mxu0 0
    %141 = vmatprep.subr.bf16.mxu0 0
    %142 = vmatpush1.bf16.msra.mxu0 0
    %143 = vmatprep.subr.bf16.mxu0 0
    %144 = vmatpush1.bf16.msra.mxu0 0
    %145 = vmatprep.subr.bf16.mxu0 0
    %146 = vmatpush1.bf16.msra.mxu0 0
    %147 = vmatprep.subr.bf16.mxu0 0
    %148 = vmatpush1.bf16.msra.mxu0 0
    %149 = vmatprep.mubr.bf16.mxu0 0
    %150 = vmatmul.mubr.bf16.gmra.mrb[0].mxu0 %v67
    %v151 = vpop.f32.mrb[0].mxu0
    %v152 = vadd.f32 0.0, %v151
    %v153 = vpop.f32.mrb[0].mxu0
    %v154 = vpop.f32.mrb[0].mxu0
    %v155 = vpop.f32.mrb[0].mxu0
    %156 = vdwg.mxu0
    %v157 = vadd.f32 %v68, %v152
    %158 = vst [vmem:[#allocation2] sm:$0xff] %v157
    // Predicated region
    $region26: #{tpu_custom_call.1} parent=1 // pred_check
      %p159 = pneg %p45
    $region27: #{tpu_custom_call.1} parent=1 // pred_check_branch
      %161 = sbr.rel (%p159) target = $region29
    $region28: #{tpu_custom_call.1} parent=1 // pred_region
      %v162 = vld [vmem:[#allocation2] sm:$0xff]
      %v163 = vld [vmem:[%s3] sm:$0x1]
      %v165 = vlaneseq
      %v166 = vshrl.u32 %v165, 7
      %v167 = vsub.s32 0, %v166
      %v168 = vrot.slane %v163, %v167
      %v170 = vadd.f32 %v162, %v168
      %v171 = vmax.f32 %v170, 0.0
      %v172 = vlaneseq
      %v173 = vshrl.u32 %v172, 7
      %s174 = smul.u32 0, 8
      %v175 = vstv %s174
      %v176 = vadd.s32 %v173, %v175
      %v177 = vlaneseq
      %v178 = vand.u32 %v177, 127
      %s179 = smul.u32 0, 128
      %v180 = vstv %s179
      %v181 = vadd.s32 %v178, %v180
      %v182 = vstv %s44
      %v183 = vadd.s32 %v176, %v182
      %v184 = vshrl.u32 %v183, 16
      %v185 = vxor.u32 %v183, %v184
      %v186 = vmul.u32 %v185, 2146121005
      %v187 = vshrl.u32 %v186, 15
      %v188 = vxor.u32 %v186, %v187
      %v189 = vmul.u32 %v188, 2221713035
      %v190 = vshrl.u32 %v189, 16
      %v191 = vxor.u32 %v189, %v190
      %s192 = smul.u32 %s44, 2654435769
      %v193 = vstv %s192
      %v194 = vadd.s32 %v181, %v193
      %v195 = vadd.s32 %v194, 2246822507
      %v196 = vshrl.u32 %v195, 16
      %v197 = vxor.u32 %v195, %v196
      %v198 = vmul.u32 %v197, 2146121005
      %v199 = vshrl.u32 %v198, 15
      %v200 = vxor.u32 %v198, %v199
      %v201 = vmul.u32 %v200, 2221713035
      %v202 = vshrl.u32 %v201, 16
      %v203 = vxor.u32 %v201, %v202
      %v204 = vxor.u32 %v191, %v203
      %v205 = vmul.u32 %v204, 2654435761
      %v206 = vshrl.u32 %v205, 16
      %v207 = vxor.u32 %v205, %v206
      %vm208 = vcmp.lt.u32.totalorder %v207, 2147483648
      %v209 = vmul.f32 %v171, 2.0
      %v210 = vsel %vm208, %v209, 0.0
      %211 = vst [vmem:[#allocation10] sm:$0xff] %v210
    $region29: #{tpu_custom_call.1} parent=1 // pred_fallthru
      _
    // Predicated region
    $region30: #{tpu_custom_call.1} parent=1 // pred_check
      _
    $region31: #{tpu_custom_call.1} parent=1 // pred_check_branch
      %213 = sbr.rel (0) target = $region33
    $region32: #{tpu_custom_call.1} parent=1 // pred_region
      %s215 = ssub.s32 128, 128
      %216 = vsyncadd [#allocation7], %s215
      %s218 = sshll.u32 [#allocation10], 4
      %s219 = int_to_ptr.vmem [resolvable:$true] %s218
      %221 = dma.vmem_to_hbm [thread:$0]  %s219, 128, %s4, [#allocation7]
    $region33: #{tpu_custom_call.1} parent=1 // pred_fallthru
      _
    // Predicated region
    $region34: #{tpu_custom_call.1} parent=1 // pred_check
      _
    $region35: #{tpu_custom_call.1} parent=1 // pred_check_branch
      %223 = sbr.rel (0) target = $region37
    $region36: #{tpu_custom_call.1} parent=1 // pred_region
      %224 = dma.done [#allocation7], 128
    $region37: #{tpu_custom_call.1} parent=1 // pred_fallthru
      _
    %225 = vsyncpa [#allocation6], 1
    %226 = vsyncpa [#allocation9], 1
    %227 = vsyncpa [#allocation7], 1

</llo_original>
